<compile_context>
chip_gen: v7x
topology: tpu7x:2x2x1
jax: 0.10.0
libtpu: 0.0.40
codegen_flags: <defaults>
</compile_context>

<pallas_src>
import jax
import jax.numpy as jnp
from jax.experimental import pallas as pl
from jax.experimental.pallas import tpu as pltpu

NEG_INF = -50000.0


def _round_up(v, m):
    return ((v + m - 1) // m) * m


def _dense_with_mask_kernel(role_ref, x_ref, w_ref, o_ref):
    """One batch tile: logits = x @ W^T, then mask logits[b, role[b]] where role[b] < E.

    role_ref : (TB, 1) int32  — role id per batch row
    x_ref    : (TB, D)        — input activations tile (full feature dim)
    w_ref    : (E,  D)        — weight in native nn.Linear layout (lane-dense)
    o_ref    : (TB, E)        — output logits tile
    """
    logits = jax.lax.dot_general(
        x_ref[...],
        w_ref[...],
        dimension_numbers=(((1,), (1,)), ((), ())),   # contract D of both -> (TB, E)
        preferred_element_type=jnp.float32,
    )

    roles = role_ref[...]                              # (TB, 1) int32
    col_ids = jax.lax.broadcasted_iota(jnp.int32, logits.shape, 1)
    # col_ids is in [0, E), so (col_ids == roles) already implies roles < E:
    # "wrong batch" rows (role >= E) are never masked — no extra compare needed.
    o_ref[...] = jnp.where(col_ids == roles, NEG_INF, logits).astype(o_ref.dtype)


def dense_with_mask_forward(x, weight, role_ids, *, block_b=None):
    """Eval-mode DenseWithMask forward.

    x        : (B, D) float32/bfloat16
    weight   : (E, D) — PyTorch nn.Linear layout, NOT transposed by the wrapper
    role_ids : (B,) int32 — ids >= E mean "wrong batch" (row is not masked)

    Returns (loss, logits) with loss=None (eval mode); logits has x's dtype.
    """
    B, D = x.shape
    E, D_w = weight.shape
    assert D == D_w, f"feature-dim mismatch: x has {D}, weight has {D_w}"
    # TODO(synk): if D ever grows past VMEM capacity, reintroduce a K-tiled
    # reduction axis; for the module's hardcoded dim=1024 one step is optimal.

    x_item = jnp.dtype(x.dtype).itemsize
    w_item = jnp.dtype(weight.dtype).itemsize
    sub = 16 if x_item < 4 else 8            # bf16 packs 16 sublanes per vreg

    if block_b is None:
        # Mem-bound on the x stream: keep the double-buffered x tile at ~16 MiB,
        # which clears ~85% of the HBM roofline and fits every generation
        # (including v7x's 64 MiB physical VMEM) with room to spare.
        block_b = 4096 if x_item < 4 else 2048
    block_b = max(sub, (block_b // sub) * sub)

    if B <= min(block_b, 256):
        tb = B                # one tile: full-extent dims are always layout-legal
    else:
        # Cap the tile so the grid has >= 2 steps: the "parallel" batch axis can
        # then shard across both TensorCores on v7x instead of idling one.
        tb = min(block_b, _round_up(pl.cdiv(B, 2), sub))

    grid = (pl.cdiv(B, tb),)
    # NOTE: when B % tb != 0 the last tile computes on padded x rows; this is
    # fine because Pallas drops the out-of-bounds output writes.

    # Scoped-VMEM budget from the padded, double-buffered block footprint.
    # v5e's default scoped limit is only 16 MiB, so set it explicitly; stay well
    # under v7x's 64 MiB physical VMEM.
    def _blk_bytes(r, c, item, nbuf=2):
        return nbuf * _round_up(max(r, 1), 8) * _round_up(max(c, 1), 128) * item

    footprint = (
        _blk_bytes(tb, D, x_item)        # x tile (double-buffered)
        + _blk_bytes(E, D, w_item)       # weight (constant index map; DMA'd once)
        + _blk_bytes(tb, E, x_item)      # output tile
        + _blk_bytes(tb, 1, 4)           # role ids (lane-padded to 128)
    )
    vmem_limit = min(max(footprint + (8 << 20), 32 << 20), 48 << 20)

    roles2d = role_ids.astype(jnp.int32).reshape(B, 1)

    cost = pl.CostEstimate(
        flops=2 * B * D * E,
        transcendentals=0,
        bytes_accessed=B * D * x_item + E * D * w_item + B * E * x_item + B * 4,
    )

    logits = pl.pallas_call(
        _dense_with_mask_kernel,
        out_shape=jax.ShapeDtypeStruct((B, E), x.dtype),
        grid_spec=pltpu.PrefetchScalarGridSpec(
            num_scalar_prefetch=0,
            grid=grid,
            in_specs=[
                pl.BlockSpec((tb, 1), lambda i: (i, 0)),    # role ids per batch tile
                pl.BlockSpec((tb, D), lambda i: (i, 0)),    # x tile (full D, lane-dense)
                pl.BlockSpec((E, D), lambda i: (0, 0)),     # whole weight, native layout
            ],
            out_specs=pl.BlockSpec((tb, E), lambda i: (i, 0)),
        ),
        compiler_params=pltpu.CompilerParams(
            dimension_semantics=("parallel",),              # batch axis -> both TCs on v7x
            vmem_limit_bytes=vmem_limit,
        ),
        cost_estimate=cost,
    )(roles2d, x, weight)

    return None, logits


def _reference_forward(x, weight, role_ids):
    """Pure-JAX reference matching the PyTorch eval-mode forward."""
    logits = x @ weight.T
    E = weight.shape[0]
    right_batch = role_ids < E
    col_ids = jnp.arange(E)[None, :]
    mask_neg = (col_ids == role_ids[:, None]) & right_batch[:, None]
    return jnp.where(mask_neg, NEG_INF, logits)


if __name__ == "__main__":
    key = jax.random.PRNGKey(0)
    k_x, k_w, k_x2, k_r2 = jax.random.split(key, 4)

    B = 4            # batch
    D = 1024         # module hardcodes self.dim = 1024
    E = 4            # num_moe

    x = jax.random.normal(k_x, (B, D), dtype=jnp.float32)
    # deterministic "linear_layer.weight", PyTorch layout (num_moe, dim)
    weight = jax.random.normal(k_w, (E, D), dtype=jnp.float32) * 0.02
    # role_ids[0] in the PyTorch module: one id per batch row; id >= num_moe
    # means "wrong batch" (no masking for that row).
    role_ids = jnp.array([0, 2, 5, 3], dtype=jnp.int32)

    # f32 path — exact semantics check against the reference.
    loss, logits = dense_with_mask_forward(x, weight, role_ids)
    logits = jax.block_until_ready(logits)
    ref = _reference_forward(x, weight, role_ids)
    assert logits.shape == (B, E)
    assert jnp.allclose(logits, ref, atol=1e-4, rtol=1e-4)
    assert loss is None

    # Multi-tile path: >=2 grid steps (both TCs on v7x) + a partial last tile.
    B2 = 520
    x2 = jax.random.normal(k_x2, (B2, D), dtype=jnp.float32)
    role2 = jax.random.randint(k_r2, (B2,), 0, 2 * E, dtype=jnp.int32)
    _, logits2 = dense_with_mask_forward(x2, weight, role2)
    logits2 = jax.block_until_ready(logits2)
    ref2 = _reference_forward(x2, weight, role2)
    assert logits2.shape == (B2, E)
    assert jnp.allclose(logits2, ref2, atol=1e-4, rtol=1e-4)

    # bf16 path — halves HBM traffic; MXU still accumulates in f32.
    _, logits_bf16 = dense_with_mask_forward(
        x.astype(jnp.bfloat16), weight.astype(jnp.bfloat16), role_ids
    )
    logits_bf16 = jax.block_until_ready(logits_bf16).astype(jnp.float32)
    unmasked = ref > NEG_INF / 2
    assert jnp.allclose(
        jnp.where(unmasked, logits_bf16, 0.0),
        jnp.where(unmasked, ref, 0.0),
        atol=3e-2, rtol=3e-2,
    )
    assert bool(jnp.all(jnp.where(unmasked, jnp.float32(-1e9), logits_bf16) < -40000.0))

    print("KERNEL_OK")
</pallas_src>

<mosaic_0001>
module attributes {stable_mosaic.version = 11 : i64} {
  func.func @_dense_with_mask_kernel(%arg0: i32, %arg1: memref<4x1xi32, #tpu.memory_space<vmem>>, %arg2: memref<4x1024xf32, #tpu.memory_space<vmem>>, %arg3: memref<4x1024xf32, #tpu.memory_space<vmem>>, %arg4: memref<4x4xf32, #tpu.memory_space<vmem>>) attributes {dimension_semantics = [#tpu.dimension_semantics<parallel>], iteration_bounds = array<i64: 1>, scalar_prefetch = 0 : i64, scratch_operands = 0 : i64, tpu.core_type = #tpu.core_type<tc>, window_params = [{transform_indices = @transform_0, window_bounds = array<i64: 4, 1>}, {transform_indices = @transform_1, window_bounds = array<i64: 4, 1024>}, {pipeline_mode = #tpu.pipeline_mode<synchronous>, transform_indices = @transform_2, window_bounds = array<i64: 4, 1024>}, {transform_indices = @transform_3, window_bounds = array<i64: 4, 4>}]} {
    %c0 = arith.constant 0 : index
    %c0_0 = arith.constant 0 : index
    %0 = vector.load %arg2[%c0, %c0_0] : memref<4x1024xf32, #tpu.memory_space<vmem>>, vector<4x1024xf32>
    %c0_1 = arith.constant 0 : index
    %c0_2 = arith.constant 0 : index
    %1 = vector.load %arg3[%c0_1, %c0_2] : memref<4x1024xf32, #tpu.memory_space<vmem>>, vector<4x1024xf32>
    %cst = arith.constant dense<0.000000e+00> : vector<4x4xf32>
    %2 = tpu.matmul %0, %1, %cst {dimension_numbers = #tpu.dot_dimension_numbers<[1], [1], [0], [0], [0, 0, 1, 0], [], []>} : vector<4x1024xf32>, vector<4x1024xf32>, vector<4x4xf32> -> vector<4x4xf32>
    %c0_3 = arith.constant 0 : index
    %c0_4 = arith.constant 0 : index
    %3 = vector.load %arg1[%c0_3, %c0_4] : memref<4x1xi32, #tpu.memory_space<vmem>>, vector<4x1xi32>
    %4 = tpu.iota {dimensions = array<i32: 1>} : vector<4x4xi32>
    %5 = vector.broadcast %3 : vector<4x1xi32> to vector<4x4xi32>
    %6 = arith.cmpi eq, %4, %5 : vector<4x4xi32>
    %cst_5 = arith.constant -5.000000e+04 : f32
    %7 = vector.broadcast %cst_5 : f32 to vector<4x4xf32>
    %8 = arith.select %6, %7, %2 : vector<4x4xi1>, vector<4x4xf32>
    %c0_6 = arith.constant 0 : index
    %c0_7 = arith.constant 0 : index
    %9 = vector.load %arg4[%c0_6, %c0_7] : memref<4x4xf32, #tpu.memory_space<vmem>>, vector<4x4xf32>
    tpu.vector_store %arg4[%c0_6, %c0_7], %8 {strides = array<i32>} : memref<4x4xf32, #tpu.memory_space<vmem>>, vector<4x4xf32>,
    return
  }
  func.func @transform_0(%arg0: i32) -> (i32, i32) {
    %c0_i32 = arith.constant 0 : i32
    %c0_i32_0 = arith.constant 0 : i32
    return %arg0, %c0_i32 : i32, i32
  }
  func.func @transform_1(%arg0: i32) -> (i32, i32) {
    %c0_i32 = arith.constant 0 : i32
    %c0_i32_0 = arith.constant 0 : i32
    return %arg0, %c0_i32 : i32, i32
  }
  func.func @transform_2(%arg0: i32) -> (i32, i32) {
    %c0_i32 = arith.constant 0 : i32
    %c0_i32_0 = arith.constant 0 : i32
    %c0_i32_1 = arith.constant 0 : i32
    return %c0_i32, %c0_i32_0 : i32, i32
  }
  func.func @transform_3(%arg0: i32) -> (i32, i32) {
    %c0_i32 = arith.constant 0 : i32
    %c0_i32_0 = arith.constant 0 : i32
    return %arg0, %c0_i32 : i32, i32
  }
}

</mosaic_0001>

<llo_original>
// kernel: tpu_custom_call.1
$region0: #{tpu_custom_call.1}
  #allocation0 [shape = 'u32[]', space=smem, size = 0x4, offset = 0x4, fixed_abs, tag = 'smem constant byte address 0x4 - core index']
  #allocation1 [shape = 'u32[144,128]{1,0:T(1,128)}', space=vmem, size = 0x12000, scoped, tag = 'internal scratch']
  %s0 = inlined_call_operand.vmem [shape: s32[4,1], index: 0, kind: input, shape index: {}]
  %s1 = inlined_call_operand.hbm [shape: f32[4,1024], index: 1, kind: input, shape index: {}]
  %s2 = inlined_call_operand.hbm [shape: f32[4,1024], index: 2, kind: input, shape index: {}]
  %s3 = inlined_call_operand.hbm [shape: f32[4,4], index: 3, kind: output, shape index: {}]
  %s4 = sld [smem:[#allocation0]]
  $region30: #{tpu_custom_call.1} parent=0
    _
  %s6 = ssub.s32 1, %s4
  %s7 = scalar_select 0, %s6, %s4
  $region1: #{tpu_custom_call.1} parent=0
    #allocation2 [shape = 'u8[16384]{0}', space=vmem, size = 0x4000, scoped, tag = 'input window, operand 1, single buffered']
    #allocation3 [shape = 's32[1]{0}', space=sflag, size = 0x4, scoped, tag = 'scoped memory for tpu_custom_call.1']
    #allocation4 [shape = 's32[1]{0}', space=sflag, size = 0x4, scoped, tag = 'scoped memory for tpu_custom_call.1']
    #allocation5 [shape = 'u8[16384]{0}', space=vmem, size = 0x4000, scoped, tag = 'input window, operand 2, single buffered']
    #allocation6 [shape = 's32[1]{0}', space=sflag, size = 0x4, scoped, tag = 'scoped memory for tpu_custom_call.1']
    #allocation7 [shape = 'u8[2048]{0}', space=vmem, size = 0x800, scoped, tag = 'output window, operand 0, single buffered']
    %8 = vsyncpa [#allocation3], 0
    %9 = vsyncpa [#allocation6], 0
    %10 = vsyncpa [#allocation4], 0
    // Predicated region
    $region2: #{tpu_custom_call.1} parent=1 // pred_check
      _
    $region3: #{tpu_custom_call.1} parent=1 // pred_check_branch
      %12 = sbr.rel (0) target = $region5
    $region4: #{tpu_custom_call.1} parent=1 // pred_region
      _
    $region5: #{tpu_custom_call.1} parent=1 // pred_fallthru
      _
    // Predicated region
    $region6: #{tpu_custom_call.1} parent=1 // pred_check
      _
    $region7: #{tpu_custom_call.1} parent=1 // pred_check_branch
      %14 = sbr.rel (0) target = $region9
    $region8: #{tpu_custom_call.1} parent=1 // pred_region
      %s16 = ssub.s32 512, 512
      %17 = vsyncadd [#allocation3], %s16
      %s19 = sshll.u32 [#allocation2], 4
      %s20 = int_to_ptr.vmem [resolvable:$true] %s19
      %22 = dma.hbm_to_vmem [thread:$0]  %s1, 512, %s20, [#allocation3]
    $region9: #{tpu_custom_call.1} parent=1 // pred_fallthru
      _
    // Predicated region
    $region10: #{tpu_custom_call.1} parent=1 // pred_check
      _
    $region11: #{tpu_custom_call.1} parent=1 // pred_check_branch
      %24 = sbr.rel (0) target = $region13
    $region12: #{tpu_custom_call.1} parent=1 // pred_region
      %s26 = ssub.s32 512, 512
      %27 = vsyncadd [#allocation6], %s26
      %s29 = sshll.u32 [#allocation5], 4
      %s30 = int_to_ptr.vmem [resolvable:$true] %s29
      %32 = dma.hbm_to_vmem [thread:$0]  %s2, 512, %s30, [#allocation6]
    $region13: #{tpu_custom_call.1} parent=1 // pred_fallthru
      _
    // Predicated region
    $region14: #{tpu_custom_call.1} parent=1 // pred_check
      _
    $region15: #{tpu_custom_call.1} parent=1 // pred_check_branch
      %34 = sbr.rel (0) target = $region17
    $region16: #{tpu_custom_call.1} parent=1 // pred_region
      %35 = dma.done [#allocation3], 512
    $region17: #{tpu_custom_call.1} parent=1 // pred_fallthru
      _
    // Predicated region
    $region18: #{tpu_custom_call.1} parent=1 // pred_check
      _
    $region19: #{tpu_custom_call.1} parent=1 // pred_check_branch
      %37 = sbr.rel (0) target = $region21
    $region20: #{tpu_custom_call.1} parent=1 // pred_region
      %38 = dma.done [#allocation6], 512
    $region21: #{tpu_custom_call.1} parent=1 // pred_fallthru
      _
    %v39 = vld [vmem:[#allocation2] sm:$0xff]
    %v40 = vld [vmem:[#allocation2 + $0x8] sm:$0xff]
    %v41 = vld [vmem:[#allocation2 + $0x10] sm:$0xff]
    %v42 = vld [vmem:[#allocation2 + $0x18] sm:$0xff]
    %v43 = vld [vmem:[#allocation5] sm:$0xff]
    %v44 = vld [vmem:[#allocation5 + $0x8] sm:$0xff]
    %v45 = vld [vmem:[#allocation5 + $0x10] sm:$0xff]
    %v46 = vld [vmem:[#allocation5 + $0x18] sm:$0xff]
    %v51 = vcombine.high %v39, %v39
    %v52 = vcombine.high %v40, %v40
    %v53 = vcombine.high %v41, %v41
    %v54 = vcombine.high %v42, %v42
    %v63 = vcombine.high %v43, %v43
    %v64 = vcombine.high %v44, %v44
    %v65 = vcombine.high %v45, %v45
    %v66 = vcombine.high %v46, %v46
    %71 = vmatprep.subr.mxu0 %v63
    %72 = vmatpush1.xpose.msra.mxu0 %v43
    %73 = vmatprep.subr.mxu0 0.0
    %74 = vmatpush1.xpose.msra.mxu0 0.0
    %75 = vmatprep.subr.mxu0 0.0
    %76 = vmatpush1.xpose.msra.mxu0 0.0
    %77 = vmatprep.subr.mxu0 0.0
    %78 = vmatpush1.xpose.msra.mxu0 0.0
    %79 = vmatprep.subr.mxu0 0.0
    %80 = vmatpush1.xpose.msra.mxu0 0.0
    %81 = vmatprep.subr.mxu0 0.0
    %82 = vmatpush1.xpose.msra.mxu0 0.0
    %83 = vmatprep.subr.mxu0 0.0
    %84 = vmatpush1.xpose.msra.mxu0 0.0
    %85 = vmatprep.subr.mxu0 0.0
    %86 = vmatpush1.xpose.msra.mxu0 0.0
    %87 = vmatprep.subr.mxu0 0.0
    %88 = vmatpush1.xpose.msra.mxu0 0.0
    %89 = vmatprep.subr.mxu0 0.0
    %90 = vmatpush1.xpose.msra.mxu0 0.0
    %91 = vmatprep.subr.mxu0 0.0
    %92 = vmatpush1.xpose.msra.mxu0 0.0
    %93 = vmatprep.subr.mxu0 0.0
    %94 = vmatpush1.xpose.msra.mxu0 0.0
    %95 = vmatprep.subr.mxu0 0.0
    %96 = vmatpush1.xpose.msra.mxu0 0.0
    %97 = vmatprep.subr.mxu0 0.0
    %98 = vmatpush1.xpose.msra.mxu0 0.0
    %99 = vmatprep.subr.mxu0 0.0
    %100 = vmatpush1.xpose.msra.mxu0 0.0
    %101 = vmatprep.subr.mxu0 0.0
    %102 = vmatpush1.xpose.msra.mxu0 0.0
    %103 = vmatprep.subr.mxu0 0.0
    %104 = vmatpush1.xpose.msra.mxu0 0.0
    %105 = vmatprep.subr.mxu0 0.0
    %106 = vmatpush1.xpose.msra.mxu0 0.0
    %107 = vmatprep.subr.mxu0 0.0
    %108 = vmatpush1.xpose.msra.mxu0 0.0
    %109 = vmatprep.subr.mxu0 0.0
    %110 = vmatpush1.xpose.msra.mxu0 0.0
    %111 = vmatprep.subr.mxu0 0.0
    %112 = vmatpush1.xpose.msra.mxu0 0.0
    %113 = vmatprep.subr.mxu0 0.0
    %114 = vmatpush1.xpose.msra.mxu0 0.0
    %115 = vmatprep.subr.mxu0 0.0
    %116 = vmatpush1.xpose.msra.mxu0 0.0
    %117 = vmatprep.subr.mxu0 0.0
    %118 = vmatpush1.xpose.msra.mxu0 0.0
    %119 = vmatprep.subr.mxu0 0.0
    %120 = vmatpush1.xpose.msra.mxu0 0.0
    %121 = vmatprep.subr.mxu0 0.0
    %122 = vmatpush1.xpose.msra.mxu0 0.0
    %123 = vmatprep.subr.mxu0 0.0
    %124 = vmatpush1.xpose.msra.mxu0 0.0
    %125 = vmatprep.subr.mxu0 0.0
    %126 = vmatpush1.xpose.msra.mxu0 0.0
    %127 = vmatprep.subr.mxu0 0.0
    %128 = vmatpush1.xpose.msra.mxu0 0.0
    %129 = vmatprep.subr.mxu0 0.0
    %130 = vmatpush1.xpose.msra.mxu0 0.0
    %131 = vmatprep.subr.mxu0 0.0
    %132 = vmatpush1.xpose.msra.mxu0 0.0
    %133 = vmatprep.subr.mxu0 0.0
    %134 = vmatpush1.xpose.msra.mxu0 0.0
    %135 = vmatprep.mubr.f32.mxu0 %v51
    %136 = vmatmul.mubr.f32.gmra.mrb[0].mxu0 %v39
    %v137 = vpop.f32.mrb[0].mxu0
    %v138 = vadd.f32 0.0, %v137
    %v139 = vpop.f32.mrb[0].mxu0
    %140 = vdwg.mxu0
    %141 = vmatprep.subr.mxu0 %v64
    %142 = vmatpush1.xpose.msra.mxu0 %v44
    %143 = vmatprep.subr.mxu0 0.0
    %144 = vmatpush1.xpose.msra.mxu0 0.0
    %145 = vmatprep.subr.mxu0 0.0
    %146 = vmatpush1.xpose.msra.mxu0 0.0
    %147 = vmatprep.subr.mxu0 0.0
    %148 = vmatpush1.xpose.msra.mxu0 0.0
    %149 = vmatprep.subr.mxu0 0.0
    %150 = vmatpush1.xpose.msra.mxu0 0.0
    %151 = vmatprep.subr.mxu0 0.0
    %152 = vmatpush1.xpose.msra.mxu0 0.0
    %153 = vmatprep.subr.mxu0 0.0
    %154 = vmatpush1.xpose.msra.mxu0 0.0
    %155 = vmatprep.subr.mxu0 0.0
    %156 = vmatpush1.xpose.msra.mxu0 0.0
    %157 = vmatprep.subr.mxu0 0.0
    %158 = vmatpush1.xpose.msra.mxu0 0.0
    %159 = vmatprep.subr.mxu0 0.0
    %160 = vmatpush1.xpose.msra.mxu0 0.0
    %161 = vmatprep.subr.mxu0 0.0
    %162 = vmatpush1.xpose.msra.mxu0 0.0
    %163 = vmatprep.subr.mxu0 0.0
    %164 = vmatpush1.xpose.msra.mxu0 0.0
    %165 = vmatprep.subr.mxu0 0.0
    %166 = vmatpush1.xpose.msra.mxu0 0.0
    %167 = vmatprep.subr.mxu0 0.0
    %168 = vmatpush1.xpose.msra.mxu0 0.0
    %169 = vmatprep.subr.mxu0 0.0
    %170 = vmatpush1.xpose.msra.mxu0 0.0
    %171 = vmatprep.subr.mxu0 0.0
    %172 = vmatpush1.xpose.msra.mxu0 0.0
    %173 = vmatprep.subr.mxu0 0.0
    %174 = vmatpush1.xpose.msra.mxu0 0.0
    %175 = vmatprep.subr.mxu0 0.0
    %176 = vmatpush1.xpose.msra.mxu0 0.0
    %177 = vmatprep.subr.mxu0 0.0
    %178 = vmatpush1.xpose.msra.mxu0 0.0
    %179 = vmatprep.subr.mxu0 0.0
    %180 = vmatpush1.xpose.msra.mxu0 0.0
    %181 = vmatprep.subr.mxu0 0.0
    %182 = vmatpush1.xpose.msra.mxu0 0.0
    %183 = vmatprep.subr.mxu0 0.0
    %184 = vmatpush1.xpose.msra.mxu0 0.0
    %185 = vmatprep.subr.mxu0 0.0
    %186 = vmatpush1.xpose.msra.mxu0 0.0
    %187 = vmatprep.subr.mxu0 0.0
    %188 = vmatpush1.xpose.msra.mxu0 0.0
    %189 = vmatprep.subr.mxu0 0.0
    %190 = vmatpush1.xpose.msra.mxu0 0.0
    %191 = vmatprep.subr.mxu0 0.0
    %192 = vmatpush1.xpose.msra.mxu0 0.0
    %193 = vmatprep.subr.mxu0 0.0
    %194 = vmatpush1.xpose.msra.mxu0 0.0
    %195 = vmatprep.subr.mxu0 0.0
    %196 = vmatpush1.xpose.msra.mxu0 0.0
    %197 = vmatprep.subr.mxu0 0.0
    %198 = vmatpush1.xpose.msra.mxu0 0.0
    %199 = vmatprep.subr.mxu0 0.0
    %200 = vmatpush1.xpose.msra.mxu0 0.0
    %201 = vmatprep.subr.mxu0 0.0
    %202 = vmatpush1.xpose.msra.mxu0 0.0
    %203 = vmatprep.subr.mxu0 0.0
    %204 = vmatpush1.xpose.msra.mxu0 0.0
    %205 = vmatprep.mubr.f32.mxu0 %v52
    %206 = vmatmul.mubr.f32.gmra.mrb[0].mxu0 %v40
    %v207 = vpop.f32.mrb[0].mxu0
    %v208 = vadd.f32 %v138, %v207
    %v209 = vpop.f32.mrb[0].mxu0
    %210 = vdwg.mxu0
    %211 = vmatprep.subr.mxu0 %v65
    %212 = vmatpush1.xpose.msra.mxu0 %v45
    %213 = vmatprep.subr.mxu0 0.0
    %214 = vmatpush1.xpose.msra.mxu0 0.0
    %215 = vmatprep.subr.mxu0 0.0
    %216 = vmatpush1.xpose.msra.mxu0 0.0
    %217 = vmatprep.subr.mxu0 0.0
    %218 = vmatpush1.xpose.msra.mxu0 0.0
    %219 = vmatprep.subr.mxu0 0.0
    %220 = vmatpush1.xpose.msra.mxu0 0.0
    %221 = vmatprep.subr.mxu0 0.0
    %222 = vmatpush1.xpose.msra.mxu0 0.0
    %223 = vmatprep.subr.mxu0 0.0
    %224 = vmatpush1.xpose.msra.mxu0 0.0
    %225 = vmatprep.subr.mxu0 0.0
    %226 = vmatpush1.xpose.msra.mxu0 0.0
    %227 = vmatprep.subr.mxu0 0.0
    %228 = vmatpush1.xpose.msra.mxu0 0.0
    %229 = vmatprep.subr.mxu0 0.0
    %230 = vmatpush1.xpose.msra.mxu0 0.0
    %231 = vmatprep.subr.mxu0 0.0
    %232 = vmatpush1.xpose.msra.mxu0 0.0
    %233 = vmatprep.subr.mxu0 0.0
    %234 = vmatpush1.xpose.msra.mxu0 0.0
    %235 = vmatprep.subr.mxu0 0.0
    %236 = vmatpush1.xpose.msra.mxu0 0.0
    %237 = vmatprep.subr.mxu0 0.0
    %238 = vmatpush1.xpose.msra.mxu0 0.0
    %239 = vmatprep.subr.mxu0 0.0
    %240 = vmatpush1.xpose.msra.mxu0 0.0
    %241 = vmatprep.subr.mxu0 0.0
    %242 = vmatpush1.xpose.msra.mxu0 0.0
    %243 = vmatprep.subr.mxu0 0.0
    %244 = vmatpush1.xpose.msra.mxu0 0.0
    %245 = vmatprep.subr.mxu0 0.0
    %246 = vmatpush1.xpose.msra.mxu0 0.0
    %247 = vmatprep.subr.mxu0 0.0
    %248 = vmatpush1.xpose.msra.mxu0 0.0
    %249 = vmatprep.subr.mxu0 0.0
    %250 = vmatpush1.xpose.msra.mxu0 0.0
    %251 = vmatprep.subr.mxu0 0.0
    %252 = vmatpush1.xpose.msra.mxu0 0.0
    %253 = vmatprep.subr.mxu0 0.0
    %254 = vmatpush1.xpose.msra.mxu0 0.0
    %255 = vmatprep.subr.mxu0 0.0
    %256 = vmatpush1.xpose.msra.mxu0 0.0
    %257 = vmatprep.subr.mxu0 0.0
    %258 = vmatpush1.xpose.msra.mxu0 0.0
    %259 = vmatprep.subr.mxu0 0.0
    %260 = vmatpush1.xpose.msra.mxu0 0.0
    %261 = vmatprep.subr.mxu0 0.0
    %262 = vmatpush1.xpose.msra.mxu0 0.0
    %263 = vmatprep.subr.mxu0 0.0
    %264 = vmatpush1.xpose.msra.mxu0 0.0
    %265 = vmatprep.subr.mxu0 0.0
    %266 = vmatpush1.xpose.msra.mxu0 0.0
    %267 = vmatprep.subr.mxu0 0.0
    %268 = vmatpush1.xpose.msra.mxu0 0.0
    %269 = vmatprep.subr.mxu0 0.0
    %270 = vmatpush1.xpose.msra.mxu0 0.0
    %271 = vmatprep.subr.mxu0 0.0
    %272 = vmatpush1.xpose.msra.mxu0 0.0
    %273 = vmatprep.subr.mxu0 0.0
    %274 = vmatpush1.xpose.msra.mxu0 0.0
    %275 = vmatprep.mubr.f32.mxu0 %v53
    %276 = vmatmul.mubr.f32.gmra.mrb[0].mxu0 %v41
    %v277 = vpop.f32.mrb[0].mxu0
    %v278 = vadd.f32 %v208, %v277
    %v279 = vpop.f32.mrb[0].mxu0
    %280 = vdwg.mxu0
    %281 = vmatprep.subr.mxu0 %v66
    %282 = vmatpush1.xpose.msra.mxu0 %v46
    %283 = vmatprep.subr.mxu0 0.0
    %284 = vmatpush1.xpose.msra.mxu0 0.0
    %285 = vmatprep.subr.mxu0 0.0
    %286 = vmatpush1.xpose.msra.mxu0 0.0
    %287 = vmatprep.subr.mxu0 0.0
    %288 = vmatpush1.xpose.msra.mxu0 0.0
    %289 = vmatprep.subr.mxu0 0.0
    %290 = vmatpush1.xpose.msra.mxu0 0.0
    %291 = vmatprep.subr.mxu0 0.0
    %292 = vmatpush1.xpose.msra.mxu0 0.0
    %293 = vmatprep.subr.mxu0 0.0
    %294 = vmatpush1.xpose.msra.mxu0 0.0
    %295 = vmatprep.subr.mxu0 0.0
    %296 = vmatpush1.xpose.msra.mxu0 0.0
    %297 = vmatprep.subr.mxu0 0.0
    %298 = vmatpush1.xpose.msra.mxu0 0.0
    %299 = vmatprep.subr.mxu0 0.0
    %300 = vmatpush1.xpose.msra.mxu0 0.0
    %301 = vmatprep.subr.mxu0 0.0
    %302 = vmatpush1.xpose.msra.mxu0 0.0
    %303 = vmatprep.subr.mxu0 0.0
    %304 = vmatpush1.xpose.msra.mxu0 0.0
    %305 = vmatprep.subr.mxu0 0.0
    %306 = vmatpush1.xpose.msra.mxu0 0.0
    %307 = vmatprep.subr.mxu0 0.0
    %308 = vmatpush1.xpose.msra.mxu0 0.0
    %309 = vmatprep.subr.mxu0 0.0
    %310 = vmatpush1.xpose.msra.mxu0 0.0
    %311 = vmatprep.subr.mxu0 0.0
    %312 = vmatpush1.xpose.msra.mxu0 0.0
    %313 = vmatprep.subr.mxu0 0.0
    %314 = vmatpush1.xpose.msra.mxu0 0.0
    %315 = vmatprep.subr.mxu0 0.0
    %316 = vmatpush1.xpose.msra.mxu0 0.0
    %317 = vmatprep.subr.mxu0 0.0
    %318 = vmatpush1.xpose.msra.mxu0 0.0
    %319 = vmatprep.subr.mxu0 0.0
    %320 = vmatpush1.xpose.msra.mxu0 0.0
    %321 = vmatprep.subr.mxu0 0.0
    %322 = vmatpush1.xpose.msra.mxu0 0.0
    %323 = vmatprep.subr.mxu0 0.0
    %324 = vmatpush1.xpose.msra.mxu0 0.0
    %325 = vmatprep.subr.mxu0 0.0
    %326 = vmatpush1.xpose.msra.mxu0 0.0
    %327 = vmatprep.subr.mxu0 0.0
    %328 = vmatpush1.xpose.msra.mxu0 0.0
    %329 = vmatprep.subr.mxu0 0.0
    %330 = vmatpush1.xpose.msra.mxu0 0.0
    %331 = vmatprep.subr.mxu0 0.0
    %332 = vmatpush1.xpose.msra.mxu0 0.0
    %333 = vmatprep.subr.mxu0 0.0
    %334 = vmatpush1.xpose.msra.mxu0 0.0
    %335 = vmatprep.subr.mxu0 0.0
    %336 = vmatpush1.xpose.msra.mxu0 0.0
    %337 = vmatprep.subr.mxu0 0.0
    %338 = vmatpush1.xpose.msra.mxu0 0.0
    %339 = vmatprep.subr.mxu0 0.0
    %340 = vmatpush1.xpose.msra.mxu0 0.0
    %341 = vmatprep.subr.mxu0 0.0
    %342 = vmatpush1.xpose.msra.mxu0 0.0
    %343 = vmatprep.subr.mxu0 0.0
    %344 = vmatpush1.xpose.msra.mxu0 0.0
    %345 = vmatprep.mubr.f32.mxu0 %v54
    %346 = vmatmul.mubr.f32.gmra.mrb[0].mxu0 %v42
    %v347 = vpop.f32.mrb[0].mxu0
    %v348 = vadd.f32 %v278, %v347
    %v349 = vpop.f32.mrb[0].mxu0
    %350 = vdwg.mxu0
    %v351 = vld [vmem:[%s0] sm:$0xf]
    %v352 = vlaneseq
    %v353 = vand.u32 %v352, 127
    %354 = vset.pattern.permute.xlu0 0
    %355 = vperm.xlu0 %354, %v351
    %v356 = vpop.permute.xlu0 %355
    %vm357 = vcmp.eq.s32.totalorder %v353, %v356
    %v358 = vsel %vm357, -50000.0, %v348
    %vm359 = vcmask 27648
    %360 = vst.msk [vmem:[#allocation7] sm:$0xf] %vm359, %v358
    // Predicated region
    $region22: #{tpu_custom_call.1} parent=1 // pred_check
      _
    $region23: #{tpu_custom_call.1} parent=1 // pred_check_branch
      %362 = sbr.rel (0) target = $region25
    $region24: #{tpu_custom_call.1} parent=1 // pred_region
      %s364 = ssub.s32 64, 64
      %365 = vsyncadd [#allocation4], %s364
      %s367 = sshll.u32 [#allocation7], 4
      %s368 = int_to_ptr.vmem [resolvable:$true] %s367
      %370 = dma.vmem_to_hbm [thread:$0]  %s368, 64, %s3, [#allocation4]
    $region25: #{tpu_custom_call.1} parent=1 // pred_fallthru
      _
    // Predicated region
    $region26: #{tpu_custom_call.1} parent=1 // pred_check
      _
    $region27: #{tpu_custom_call.1} parent=1 // pred_check_branch
      %372 = sbr.rel (0) target = $region29
    $region28: #{tpu_custom_call.1} parent=1 // pred_region
      %373 = dma.done [#allocation4], 64
    $region29: #{tpu_custom_call.1} parent=1 // pred_fallthru
      _
    %374 = vsyncpa [#allocation3], 1
    %375 = vsyncpa [#allocation6], 1
    %376 = vsyncpa [#allocation4], 1

</llo_original>
